<compile_context>
chip_gen: v6e
topology: v6e:2x2x1
jax: 0.10.0
libtpu: 0.0.40
codegen_flags: <defaults>
</compile_context>

<pallas_src>
import jax
import jax.numpy as jnp
from jax.experimental import pallas as pl
from jax.experimental.pallas import tpu as pltpu


def _fusion_kernel(x_ref, y_ref, o_ref):
    x = x_ref[...]
    y = y_ref[...]
    diff = x - y
    # relu(x + y) - (x - y)^2  ; scalar 0.0 avoids materializing a zero bcast.
    o_ref[...] = jnp.maximum(x + y, 0.0) - diff * diff


# ~2 MiB per operand block: 3 operands x 2 buffers = 12 MiB scoped VMEM,
# safe on v5e (16 MiB default) and well under v6e/v7x limits.
_TARGET_BLOCK_BYTES = 2 * 1024 * 1024

# Sublane multiple required for the second-to-last block dim, per item size.
_SUBLANE = {4: 8, 2: 16, 1: 32}


def fusion(x, y):
    """Compute -(x - y)**2 + relu(x + y) with a Pallas TPU kernel."""
    assert x.shape == y.shape and x.dtype == y.dtype
    orig_shape = x.shape
    n = x.size
    itemsize = jnp.dtype(x.dtype).itemsize
    sublane = _SUBLANE.get(itemsize, 8)

    # Pick the widest lane-dense width (multiple of 128) dividing n so the
    # reshape is a free bitcast; fall back to tail-padding only if needed.
    cols = None
    for c in (8192, 4096, 2048, 1024, 512, 384, 256, 128):
        if n % c == 0:
            cols = c
            break
    pad = 0
    if cols is None:
        cols = 1024
        pad = (-n) % cols

    xf = x.reshape(-1)
    yf = y.reshape(-1)
    if pad:
        xf = jnp.pad(xf, (0, pad))
        yf = jnp.pad(yf, (0, pad))
    rows = (n + pad) // cols
    xf = xf.reshape(rows, cols)
    yf = yf.reshape(rows, cols)

    # Block rows: aim for ~_TARGET_BLOCK_BYTES per operand, keep the sublane
    # alignment, and collapse to a single full-extent block for small inputs
    # (full-dim blocks are always legal regardless of alignment).
    tile_rows = max(1, _TARGET_BLOCK_BYTES // (cols * itemsize))
    tile_rows = max(sublane, (tile_rows // sublane) * sublane)
    if tile_rows >= rows:
        tile_rows = rows

    grid = (pl.cdiv(rows, tile_rows),)
    spec = pl.BlockSpec((tile_rows, cols), lambda i: (i, 0))

    out = pl.pallas_call(
        _fusion_kernel,
        out_shape=jax.ShapeDtypeStruct((rows, cols), x.dtype),
        grid_spec=pltpu.PrefetchScalarGridSpec(
            num_scalar_prefetch=0,
            grid=grid,
            in_specs=[spec, spec],
            out_specs=spec,
        ),
        compiler_params=pltpu.CompilerParams(
            dimension_semantics=("parallel",)
        ),
    )(xf, yf)

    if pad:
        return out.reshape(-1)[:n].reshape(orig_shape)
    return out.reshape(orig_shape)


if __name__ == "__main__":
    key = jax.random.PRNGKey(0)
    kx, ky = jax.random.split(key)
    # Small NCHW-shaped inputs (batch=2, channels=4, spatial=16x16).
    x = jax.random.normal(kx, (2, 4, 16, 16), dtype=jnp.float32)
    y = jax.random.normal(ky, (2, 4, 16, 16), dtype=jnp.float32)

    out = fusion(x, y)
    jax.block_until_ready(out)

    # Reference check (plain JAX).
    ref = -(x - y) ** 2 + jax.nn.relu(x + y)
    assert out.shape == x.shape
    assert jnp.allclose(out, ref, atol=1e-6), "mismatch vs reference"

    print("KERNEL_OK")
</pallas_src>

<mosaic_0001>
module attributes {stable_mosaic.version = 11 : i64} {
  func.func @_fusion_kernel(%arg0: i32, %arg1: memref<1x2048xf32, #tpu.memory_space<vmem>>, %arg2: memref<1x2048xf32, #tpu.memory_space<vmem>>, %arg3: memref<1x2048xf32, #tpu.memory_space<vmem>>) attributes {dimension_semantics = [#tpu.dimension_semantics<parallel>], iteration_bounds = array<i64: 1>, scalar_prefetch = 0 : i64, scratch_operands = 0 : i64, tpu.core_type = #tpu.core_type<tc>, window_params = [{transform_indices = @transform_0, window_bounds = array<i64: 1, 2048>}, {transform_indices = @transform_1, window_bounds = array<i64: 1, 2048>}, {transform_indices = @transform_2, window_bounds = array<i64: 1, 2048>}]} {
    %c0 = arith.constant 0 : index
    %c0_0 = arith.constant 0 : index
    %0 = vector.load %arg1[%c0, %c0_0] : memref<1x2048xf32, #tpu.memory_space<vmem>>, vector<1x2048xf32>
    %c0_1 = arith.constant 0 : index
    %c0_2 = arith.constant 0 : index
    %1 = vector.load %arg2[%c0_1, %c0_2] : memref<1x2048xf32, #tpu.memory_space<vmem>>, vector<1x2048xf32>
    %2 = arith.subf %0, %1 : vector<1x2048xf32>
    %3 = arith.addf %0, %1 : vector<1x2048xf32>
    %cst = arith.constant 0.000000e+00 : f32
    %4 = vector.broadcast %cst : f32 to vector<1x2048xf32>
    %5 = arith.maximumf %3, %4 : vector<1x2048xf32>
    %6 = arith.mulf %2, %2 : vector<1x2048xf32>
    %7 = arith.subf %5, %6 : vector<1x2048xf32>
    %c0_3 = arith.constant 0 : index
    %c0_4 = arith.constant 0 : index
    %8 = vector.load %arg3[%c0_3, %c0_4] : memref<1x2048xf32, #tpu.memory_space<vmem>>, vector<1x2048xf32>
    tpu.vector_store %arg3[%c0_3, %c0_4], %7 {strides = array<i32>} : memref<1x2048xf32, #tpu.memory_space<vmem>>, vector<1x2048xf32>,
    return
  }
  func.func @transform_0(%arg0: i32) -> (i32, i32) {
    %c0_i32 = arith.constant 0 : i32
    %c0_i32_0 = arith.constant 0 : i32
    return %arg0, %c0_i32 : i32, i32
  }
  func.func @transform_1(%arg0: i32) -> (i32, i32) {
    %c0_i32 = arith.constant 0 : i32
    %c0_i32_0 = arith.constant 0 : i32
    return %arg0, %c0_i32 : i32, i32
  }
  func.func @transform_2(%arg0: i32) -> (i32, i32) {
    %c0_i32 = arith.constant 0 : i32
    %c0_i32_0 = arith.constant 0 : i32
    return %arg0, %c0_i32 : i32, i32
  }
}

</mosaic_0001>

<llo_original>
// kernel: tpu_custom_call.1
$region0: #{tpu_custom_call.1}
  #allocation0 [shape = 'u32[]', space=smem, size = 0x4, offset = 0x4, fixed_abs, tag = 'smem constant byte address 0x4 - core index']
  #allocation1 [shape = 'u32[144,128]{1,0:T(1,128)}', space=vmem, size = 0x12000, scoped, tag = 'internal scratch']
  %s0 = inlined_call_operand.hbm [shape: f32[1,2048], index: 0, kind: input, shape index: {}]
  %s1 = inlined_call_operand.hbm [shape: f32[1,2048], index: 1, kind: input, shape index: {}]
  %s2 = inlined_call_operand.hbm [shape: f32[1,2048], index: 2, kind: output, shape index: {}]
  %s3 = sld [smem:[#allocation0]]
  $region26: #{tpu_custom_call.1} parent=0
    _
  %s5 = ssub.s32 1, %s3
  %s6 = scalar_select 0, %s5, %s3
  $region1: #{tpu_custom_call.1} parent=0
    #allocation2 [shape = 'u8[8192]{0}', space=vmem, size = 0x2000, scoped, tag = 'input window, operand 0, single buffered']
    #allocation3 [shape = 's32[1]{0}', space=sflag, size = 0x4, scoped, tag = 'scoped memory for tpu_custom_call.1']
    #allocation4 [shape = 's32[1]{0}', space=sflag, size = 0x4, scoped, tag = 'scoped memory for tpu_custom_call.1']
    #allocation5 [shape = 'u8[8192]{0}', space=vmem, size = 0x2000, scoped, tag = 'input window, operand 1, single buffered']
    #allocation6 [shape = 's32[1]{0}', space=sflag, size = 0x4, scoped, tag = 'scoped memory for tpu_custom_call.1']
    #allocation7 [shape = 'u8[8192]{0}', space=vmem, size = 0x2000, scoped, tag = 'output window, operand 0, single buffered']
    %7 = vsyncpa [#allocation3], 0
    %8 = vsyncpa [#allocation6], 0
    %9 = vsyncpa [#allocation4], 0
    // Predicated region
    $region2: #{tpu_custom_call.1} parent=1 // pred_check
      _
    $region3: #{tpu_custom_call.1} parent=1 // pred_check_branch
      %11 = sbr.rel (0) target = $region5
    $region4: #{tpu_custom_call.1} parent=1 // pred_region
      %s13 = ssub.s32 256, 256
      %14 = vsyncadd [#allocation3], %s13
      %s16 = sshll.u32 [#allocation2], 4
      %s17 = int_to_ptr.vmem [resolvable:$true] %s16
      %19 = dma.hbm_to_vmem [thread:$0]  %s0, 256, %s17, [#allocation3]
    $region5: #{tpu_custom_call.1} parent=1 // pred_fallthru
      _
    // Predicated region
    $region6: #{tpu_custom_call.1} parent=1 // pred_check
      _
    $region7: #{tpu_custom_call.1} parent=1 // pred_check_branch
      %21 = sbr.rel (0) target = $region9
    $region8: #{tpu_custom_call.1} parent=1 // pred_region
      %s23 = ssub.s32 256, 256
      %24 = vsyncadd [#allocation6], %s23
      %s26 = sshll.u32 [#allocation5], 4
      %s27 = int_to_ptr.vmem [resolvable:$true] %s26
      %29 = dma.hbm_to_vmem [thread:$0]  %s1, 256, %s27, [#allocation6]
    $region9: #{tpu_custom_call.1} parent=1 // pred_fallthru
      _
    // Predicated region
    $region10: #{tpu_custom_call.1} parent=1 // pred_check
      _
    $region11: #{tpu_custom_call.1} parent=1 // pred_check_branch
      %31 = sbr.rel (0) target = $region13
    $region12: #{tpu_custom_call.1} parent=1 // pred_region
      %32 = dma.done [#allocation3], 256
    $region13: #{tpu_custom_call.1} parent=1 // pred_fallthru
      _
    // Predicated region
    $region14: #{tpu_custom_call.1} parent=1 // pred_check
      _
    $region15: #{tpu_custom_call.1} parent=1 // pred_check_branch
      %34 = sbr.rel (0) target = $region17
    $region16: #{tpu_custom_call.1} parent=1 // pred_region
      %35 = dma.done [#allocation6], 256
    $region17: #{tpu_custom_call.1} parent=1 // pred_fallthru
      _
    %v36 = vld [vmem:[#allocation2] sm:$0xff]
    %v37 = vld [vmem:[#allocation2 + $0x8] sm:$0xff]
    %v38 = vld [vmem:[#allocation5] sm:$0xff]
    %v39 = vld [vmem:[#allocation5 + $0x8] sm:$0xff]
    %v40 = vsub.f32 %v36, %v38
    %v41 = vsub.f32 %v37, %v39
    %v42 = vadd.f32 %v36, %v38
    %v43 = vadd.f32 %v37, %v39
    %v44 = vmax.f32 %v42, 0.0
    %v45 = vmax.f32 %v43, 0.0
    %v46 = vmul.f32 %v40, %v40
    %v47 = vmul.f32 %v41, %v41
    %v48 = vsub.f32 %v44, %v46
    %v49 = vsub.f32 %v45, %v47
    %50 = vst [vmem:[#allocation7] sm:$0xff] %v48
    %51 = vst [vmem:[#allocation7 + $0x8] sm:$0xff] %v49
    // Predicated region
    $region18: #{tpu_custom_call.1} parent=1 // pred_check
      _
    $region19: #{tpu_custom_call.1} parent=1 // pred_check_branch
      %53 = sbr.rel (0) target = $region21
    $region20: #{tpu_custom_call.1} parent=1 // pred_region
      %s55 = ssub.s32 256, 256
      %56 = vsyncadd [#allocation4], %s55
      %s58 = sshll.u32 [#allocation7], 4
      %s59 = int_to_ptr.vmem [resolvable:$true] %s58
      %61 = dma.vmem_to_hbm [thread:$0]  %s59, 256, %s2, [#allocation4]
    $region21: #{tpu_custom_call.1} parent=1 // pred_fallthru
      _
    // Predicated region
    $region22: #{tpu_custom_call.1} parent=1 // pred_check
      _
    $region23: #{tpu_custom_call.1} parent=1 // pred_check_branch
      %63 = sbr.rel (0) target = $region25
    $region24: #{tpu_custom_call.1} parent=1 // pred_region
      %64 = dma.done [#allocation4], 256
    $region25: #{tpu_custom_call.1} parent=1 // pred_fallthru
      _
    %65 = vsyncpa [#allocation3], 1
    %66 = vsyncpa [#allocation6], 1
    %67 = vsyncpa [#allocation4], 1

</llo_original>
